<compile_context>
chip_gen: v7x
topology: tpu7x:2x2x1
jax: 0.10.0
libtpu: 0.0.40
codegen_flags: <defaults>
</compile_context>

<pallas_src>
import jax
import jax.numpy as jnp
from jax.experimental import pallas as pl
from jax.experimental.pallas import tpu as pltpu


# Per-grid-step live VMEM budget (bytes) used to size the batch tile.  Chosen
# to sit comfortably under the default scoped VMEM limit on every generation
# (16 MiB v5e, 32 MiB v6e/v7x) and well under v7x's 64 MiB physical VMEM.
_VMEM_STEP_BUDGET = 12 * 1024 * 1024


def attention_kernel(img_ref, dec_ref, wenc_ref, wdec_ref, bias_ref, wfull_ref,
                     wenc_out_ref, alpha_ref):
    tb, n, e = img_ref.shape
    a = wenc_ref.shape[1]

    img = img_ref[...]                                   # (TB, N, E)
    dec = dec_ref[...]                                   # (TB, D)

    # attn1 = encoder_attn(image_features): one folded (TB*N, E) @ (E, A) MXU
    # matmul per grid step, f32 accumulation.  (bf16 inputs, if passed from
    # HBM, are promoted here; no extra in-kernel down-cast is performed.)
    attn1 = jnp.dot(img.reshape(tb * n, e), wenc_ref[...],
                    preferred_element_type=jnp.float32).reshape(tb, n, a)

    # attn2 = decoder_attn(decoder_hidden) with the folded (b_enc + b_dec)
    # bias: the bias add only touches the (TB, A) tensor, never (TB, N, A).
    attn2 = jnp.dot(dec, wdec_ref[...],
                    preferred_element_type=jnp.float32) + bias_ref[...]

    # relu(attn1 + attn2.unsqueeze(1))  -> (TB, N, A), A lane-dense.
    h = jnp.maximum(attn1 + attn2[:, None, :], 0.0)

    # full_attn as a VPU multiply + lane reduction over A (no (A, 1) matvec).
    # keepdims keeps the region axis N on sublanes for the whole softmax /
    # weighted-sum chain, avoiding a lane<->sublane round trip of the scores.
    # b_full is omitted: a uniform pre-softmax shift cancels exactly.
    scores = jnp.sum(h * wfull_ref[...], axis=-1, keepdims=True)   # (TB, N, 1)

    # Softmax over the region axis (PyTorch dim=1) as sublane reductions.
    m = jnp.max(scores, axis=1, keepdims=True)                     # (TB, 1, 1)
    ex = jnp.exp(scores - m)                                       # (TB, N, 1)
    denom = jnp.sum(ex, axis=1, keepdims=True)                     # (TB, 1, 1)
    alpha = ex * pl.reciprocal(denom, approx=False)                # (TB, N, 1)

    # (image_features * alpha).sum(dim=1) -> (TB, E); N reduces on sublanes,
    # matching alpha's layout, E stays lane-dense for the output store.
    weighted = jnp.sum(img.astype(jnp.float32) * alpha, axis=1)    # (TB, E)

    wenc_out_ref[...] = weighted.astype(wenc_out_ref.dtype)
    # Single relayout in the whole chain: (TB, N, 1) -> lane-major (TB, N).
    alpha_ref[...] = alpha[:, :, 0].astype(alpha_ref.dtype)


def _choose_block_b(B, N, E, D, A, in_itemsize):
    """VMEM-budgeted batch tile: multiple of 8, >=4 steps for large B."""
    # Per-row bytes live in one grid step: double-buffered streamed inputs,
    # f32 intermediates (attn1, h, softmax temps), double-buffered outputs.
    per_row = (2 * N * E + 2 * D) * in_itemsize
    per_row += (2 * N * A + 4 * N + 3 * E + 2 * N + 8) * 4
    cap = max(8, ((_VMEM_STEP_BUDGET // per_row) // 8) * 8)

    if B <= 32:
        # Fixed-overhead regime: whole batch in one grid step (blocks equal
        # the full array dims, so the (8, 128) tiling rule is satisfied).
        return B
    # Large B: at least 4 grid steps, capped by the per-step VMEM budget.
    return max(8, min(cap, 8 * pl.cdiv(pl.cdiv(B, 4), 8)))


def attention_forward(image_features, decoder_hidden, params, *,
                      block_b=None, vmem_limit_bytes=32 * 1024 * 1024):
    B, N, E = image_features.shape
    D = decoder_hidden.shape[-1]
    A = params["w_enc"].shape[1]

    # Fold the encoder bias into the decoder bias once (an (1, A)-element op);
    # the kernel then never adds a bias to the (TB, N, A) tensor.
    bias = params["b_enc"] + params["b_dec"]

    itemsize = jnp.dtype(image_features.dtype).itemsize
    if block_b is None:
        block_b = _choose_block_b(B, N, E, D, A, itemsize)
    block_b = min(block_b, B)
    if block_b < B:
        block_b = 8 * pl.cdiv(block_b, 8)      # tiled blocks must be 8-aligned

    num_blocks = pl.cdiv(B, block_b)
    if num_blocks > 1 and num_blocks % 2 == 1:
        # Even block count so v7x's two TensorCores get balanced batch tiles.
        num_blocks += 1
        block_b = max(8, 8 * pl.cdiv(pl.cdiv(B, num_blocks), 8))
    Bp = num_blocks * block_b

    if Bp != B:
        pad = Bp - B
        # Padded rows produce a uniform softmax (constant score row) — benign,
        # they are sliced off below; never reuse alpha[B:].
        image_features = jnp.pad(image_features, ((0, pad), (0, 0), (0, 0)))
        decoder_hidden = jnp.pad(decoder_hidden, ((0, pad), (0, 0)))

    out_shapes = (
        jax.ShapeDtypeStruct((Bp, E), image_features.dtype),  # weighted encoding
        jax.ShapeDtypeStruct((Bp, N), jnp.float32),           # alpha pinned to f32
    )

    grid_spec = pltpu.PrefetchScalarGridSpec(
        num_scalar_prefetch=0,
        grid=(num_blocks,),
        in_specs=[
            pl.BlockSpec((block_b, N, E), lambda b: (b, 0, 0)),   # image_features
            pl.BlockSpec((block_b, D), lambda b: (b, 0)),         # decoder_hidden
            pl.BlockSpec((E, A), lambda b: (0, 0)),               # W_enc^T (resident)
            pl.BlockSpec((D, A), lambda b: (0, 0)),               # W_dec^T (resident)
            pl.BlockSpec((1, A), lambda b: (0, 0)),               # b_enc + b_dec
            pl.BlockSpec((1, A), lambda b: (0, 0)),               # w_full as a row
        ],
        out_specs=[
            pl.BlockSpec((block_b, E), lambda b: (b, 0)),
            pl.BlockSpec((block_b, N), lambda b: (b, 0)),
        ],
    )

    weighted, alpha = pl.pallas_call(
        attention_kernel,
        out_shape=out_shapes,
        grid_spec=grid_spec,
        compiler_params=pltpu.CompilerParams(
            dimension_semantics=("parallel",),
            vmem_limit_bytes=vmem_limit_bytes),
    )(image_features, decoder_hidden,
      params["w_enc"], params["w_dec"], bias, params["w_full"])

    return weighted[:B], alpha[:B]


def reference_forward(image_features, decoder_hidden, params):
    attn1 = image_features @ params["w_enc"] + params["b_enc"][0]        # (B, N, A)
    attn2 = decoder_hidden @ params["w_dec"] + params["b_dec"][0]        # (B, A)
    scores = (jax.nn.relu(attn1 + attn2[:, None, :]) @ params["w_full"].T
              + params["b_full"][0])                                     # (B, N, 1)
    alpha = jax.nn.softmax(scores, axis=1)
    weighted = (image_features * alpha).sum(axis=1)                      # (B, E)
    return weighted, alpha[..., 0]


if __name__ == "__main__":
    # Small shapes consistent with the module's forward pass.
    B, N = 2, 16          # batch, number of image regions
    E, D, A = 32, 48, 64  # encoder_dim, decoder_dim, attention_dim

    key = jax.random.PRNGKey(0)
    (k_img, k_dec, k1, k2, k3, k4, k5, k6,
     k_img2, k_dec2) = jax.random.split(key, 10)

    image_features = jax.random.normal(k_img, (B, N, E), dtype=jnp.float32)
    decoder_hidden = jax.random.normal(k_dec, (B, D), dtype=jnp.float32)

    # Parameters stored pre-transposed: (in, out); w_full kept as a (1, A) row.
    params = {
        "w_enc":  0.1 * jax.random.normal(k1, (E, A), dtype=jnp.float32),
        "b_enc":  0.1 * jax.random.normal(k2, (1, A), dtype=jnp.float32),
        "w_dec":  0.1 * jax.random.normal(k3, (D, A), dtype=jnp.float32),
        "b_dec":  0.1 * jax.random.normal(k4, (1, A), dtype=jnp.float32),
        "w_full": 0.1 * jax.random.normal(k5, (1, A), dtype=jnp.float32),
        # b_full only shifts every pre-softmax score by the same constant, so
        # the kernel drops it (exact); it stays in the reference as proof.
        "b_full": 0.1 * jax.random.normal(k6, (1, 1), dtype=jnp.float32),
    }

    # Single-block path (B <= 32).
    weighted, alpha = attention_forward(image_features, decoder_hidden, params)
    jax.block_until_ready((weighted, alpha))

    ref_weighted, ref_alpha = reference_forward(image_features, decoder_hidden, params)
    assert weighted.shape == (B, E) and alpha.shape == (B, N)
    assert jnp.allclose(weighted, ref_weighted, rtol=1e-5, atol=1e-5)
    assert jnp.allclose(alpha, ref_alpha, rtol=1e-5, atol=1e-5)

    # Multi-block path (tiled, padded batch; exercises the VMEM-budgeted grid).
    B2 = 80
    image_features2 = jax.random.normal(k_img2, (B2, N, E), dtype=jnp.float32)
    decoder_hidden2 = jax.random.normal(k_dec2, (B2, D), dtype=jnp.float32)

    weighted2, alpha2 = attention_forward(image_features2, decoder_hidden2, params)
    jax.block_until_ready((weighted2, alpha2))

    ref_w2, ref_a2 = reference_forward(image_features2, decoder_hidden2, params)
    assert weighted2.shape == (B2, E) and alpha2.shape == (B2, N)
    assert jnp.allclose(weighted2, ref_w2, rtol=1e-5, atol=1e-5)
    assert jnp.allclose(alpha2, ref_a2, rtol=1e-5, atol=1e-5)

    print("KERNEL_OK")
</pallas_src>

<mosaic_0001>
module attributes {stable_mosaic.version = 11 : i64} {
  func.func @attention_kernel(%arg0: i32, %arg1: memref<2x16x32xf32, #tpu.memory_space<vmem>>, %arg2: memref<2x48xf32, #tpu.memory_space<vmem>>, %arg3: memref<32x64xf32, #tpu.memory_space<vmem>>, %arg4: memref<48x64xf32, #tpu.memory_space<vmem>>, %arg5: memref<1x64xf32, #tpu.memory_space<vmem>>, %arg6: memref<1x64xf32, #tpu.memory_space<vmem>>, %arg7: memref<2x32xf32, #tpu.memory_space<vmem>>, %arg8: memref<2x16xf32, #tpu.memory_space<vmem>>) attributes {dimension_semantics = [#tpu.dimension_semantics<parallel>], iteration_bounds = array<i64: 1>, scalar_prefetch = 0 : i64, scratch_operands = 0 : i64, tpu.core_type = #tpu.core_type<tc>, window_params = [{transform_indices = @transform_0, window_bounds = array<i64: 2, 16, 32>}, {transform_indices = @transform_1, window_bounds = array<i64: 2, 48>}, {pipeline_mode = #tpu.pipeline_mode<synchronous>, transform_indices = @transform_2, window_bounds = array<i64: 32, 64>}, {pipeline_mode = #tpu.pipeline_mode<synchronous>, transform_indices = @transform_3, window_bounds = array<i64: 48, 64>}, {pipeline_mode = #tpu.pipeline_mode<synchronous>, transform_indices = @transform_4, window_bounds = array<i64: 1, 64>}, {pipeline_mode = #tpu.pipeline_mode<synchronous>, transform_indices = @transform_5, window_bounds = array<i64: 1, 64>}, {transform_indices = @transform_6, window_bounds = array<i64: 2, 32>}, {transform_indices = @transform_7, window_bounds = array<i64: 2, 16>}]} {
    %c0 = arith.constant 0 : index
    %c0_0 = arith.constant 0 : index
    %c0_1 = arith.constant 0 : index
    %0 = vector.load %arg1[%c0, %c0_0, %c0_1] : memref<2x16x32xf32, #tpu.memory_space<vmem>>, vector<2x16x32xf32>
    %c0_2 = arith.constant 0 : index
    %c0_3 = arith.constant 0 : index
    %1 = vector.load %arg2[%c0_2, %c0_3] : memref<2x48xf32, #tpu.memory_space<vmem>>, vector<2x48xf32>
    %2 = vector.shape_cast %0 : vector<2x16x32xf32> to vector<32x32xf32>
    %c0_4 = arith.constant 0 : index
    %c0_5 = arith.constant 0 : index
    %3 = vector.load %arg3[%c0_4, %c0_5] : memref<32x64xf32, #tpu.memory_space<vmem>>, vector<32x64xf32>
    %cst = arith.constant dense<0.000000e+00> : vector<32x64xf32>
    %4 = tpu.matmul %2, %3, %cst {dimension_numbers = #tpu.dot_dimension_numbers<[1], [0], [0], [1], [0, 0, 1, 1], [], []>} : vector<32x32xf32>, vector<32x64xf32>, vector<32x64xf32> -> vector<32x64xf32>
    %5 = vector.shape_cast %4 : vector<32x64xf32> to vector<2x16x64xf32>
    %c0_6 = arith.constant 0 : index
    %c0_7 = arith.constant 0 : index
    %6 = vector.load %arg4[%c0_6, %c0_7] : memref<48x64xf32, #tpu.memory_space<vmem>>, vector<48x64xf32>
    %cst_8 = arith.constant dense<0.000000e+00> : vector<2x64xf32>
    %7 = tpu.matmul %1, %6, %cst_8 {dimension_numbers = #tpu.dot_dimension_numbers<[1], [0], [0], [1], [0, 0, 1, 1], [], []>} : vector<2x48xf32>, vector<48x64xf32>, vector<2x64xf32> -> vector<2x64xf32>
    %c0_9 = arith.constant 0 : index
    %c0_10 = arith.constant 0 : index
    %8 = vector.load %arg5[%c0_9, %c0_10] : memref<1x64xf32, #tpu.memory_space<vmem>>, vector<1x64xf32>
    %9 = vector.broadcast %8 : vector<1x64xf32> to vector<2x64xf32>
    %10 = arith.addf %7, %9 : vector<2x64xf32>
    %11 = vector.shape_cast %10 : vector<2x64xf32> to vector<2x1x64xf32>
    %12 = vector.broadcast %11 : vector<2x1x64xf32> to vector<2x16x64xf32>
    %13 = arith.addf %5, %12 : vector<2x16x64xf32>
    %cst_11 = arith.constant 0.000000e+00 : f32
    %14 = vector.broadcast %cst_11 : f32 to vector<2x16x64xf32>
    %15 = arith.maximumf %13, %14 : vector<2x16x64xf32>
    %c0_12 = arith.constant 0 : index
    %c0_13 = arith.constant 0 : index
    %16 = vector.load %arg6[%c0_12, %c0_13] : memref<1x64xf32, #tpu.memory_space<vmem>>, vector<1x64xf32>
    %17 = vector.shape_cast %16 : vector<1x64xf32> to vector<1x1x64xf32>
    %18 = vector.broadcast %17 : vector<1x1x64xf32> to vector<2x16x64xf32>
    %19 = arith.mulf %15, %18 : vector<2x16x64xf32>
    %cst_14 = arith.constant dense<0.000000e+00> : vector<2x16xf32>
    %20 = vector.multi_reduction <add>, %19, %cst_14 [2] : vector<2x16x64xf32> to vector<2x16xf32>
    %21 = vector.shape_cast %20 : vector<2x16xf32> to vector<2x16x1xf32>
    %cst_15 = arith.constant dense<0xFF800000> : vector<2x1xf32>
    %22 = vector.multi_reduction <maximumf>, %21, %cst_15 [1] : vector<2x16x1xf32> to vector<2x1xf32>
    %23 = vector.shape_cast %22 : vector<2x1xf32> to vector<2x1x1xf32>
    %24 = vector.broadcast %23 : vector<2x1x1xf32> to vector<2x16x1xf32>
    %25 = arith.subf %21, %24 : vector<2x16x1xf32>
    %26 = math.exp %25 : vector<2x16x1xf32>
    %cst_16 = arith.constant dense<0.000000e+00> : vector<2x1xf32>
    %27 = vector.multi_reduction <add>, %26, %cst_16 [1] : vector<2x16x1xf32> to vector<2x1xf32>
    %28 = vector.shape_cast %27 : vector<2x1xf32> to vector<2x1x1xf32>
    %29 = tpu.reciprocal %28 : vector<2x1x1xf32> -> vector<2x1x1xf32>
    %30 = vector.broadcast %29 : vector<2x1x1xf32> to vector<2x16x1xf32>
    %31 = arith.mulf %26, %30 : vector<2x16x1xf32>
    %32 = vector.broadcast %31 : vector<2x16x1xf32> to vector<2x16x32xf32>
    %33 = arith.mulf %0, %32 : vector<2x16x32xf32>
    %cst_17 = arith.constant dense<0.000000e+00> : vector<2x32xf32>
    %34 = vector.multi_reduction <add>, %33, %cst_17 [1] : vector<2x16x32xf32> to vector<2x32xf32>
    %c0_18 = arith.constant 0 : index
    %c0_19 = arith.constant 0 : index
    %35 = vector.load %arg7[%c0_18, %c0_19] : memref<2x32xf32, #tpu.memory_space<vmem>>, vector<2x32xf32>
    tpu.vector_store %arg7[%c0_18, %c0_19], %34 {strides = array<i32>} : memref<2x32xf32, #tpu.memory_space<vmem>>, vector<2x32xf32>,
    %36 = vector.shape_cast %31 : vector<2x16x1xf32> to vector<2x16xf32>
    %c0_20 = arith.constant 0 : index
    %c0_21 = arith.constant 0 : index
    %37 = vector.load %arg8[%c0_20, %c0_21] : memref<2x16xf32, #tpu.memory_space<vmem>>, vector<2x16xf32>
    tpu.vector_store %arg8[%c0_20, %c0_21], %36 {strides = array<i32>} : memref<2x16xf32, #tpu.memory_space<vmem>>, vector<2x16xf32>,
    return
  }
  func.func @transform_0(%arg0: i32) -> (i32, i32, i32) {
    %c0_i32 = arith.constant 0 : i32
    %c0_i32_0 = arith.constant 0 : i32
    %c0_i32_1 = arith.constant 0 : i32
    return %arg0, %c0_i32, %c0_i32_0 : i32, i32, i32
  }
  func.func @transform_1(%arg0: i32) -> (i32, i32) {
    %c0_i32 = arith.constant 0 : i32
    %c0_i32_0 = arith.constant 0 : i32
    return %arg0, %c0_i32 : i32, i32
  }
  func.func @transform_2(%arg0: i32) -> (i32, i32) {
    %c0_i32 = arith.constant 0 : i32
    %c0_i32_0 = arith.constant 0 : i32
    %c0_i32_1 = arith.constant 0 : i32
    return %c0_i32, %c0_i32_0 : i32, i32
  }
  func.func @transform_3(%arg0: i32) -> (i32, i32) {
    %c0_i32 = arith.constant 0 : i32
    %c0_i32_0 = arith.constant 0 : i32
    %c0_i32_1 = arith.constant 0 : i32
    return %c0_i32, %c0_i32_0 : i32, i32
  }
  func.func @transform_4(%arg0: i32) -> (i32, i32) {
    %c0_i32 = arith.constant 0 : i32
    %c0_i32_0 = arith.constant 0 : i32
    %c0_i32_1 = arith.constant 0 : i32
    return %c0_i32, %c0_i32_0 : i32, i32
  }
  func.func @transform_5(%arg0: i32) -> (i32, i32) {
    %c0_i32 = arith.constant 0 : i32
    %c0_i32_0 = arith.constant 0 : i32
    %c0_i32_1 = arith.constant 0 : i32
    return %c0_i32, %c0_i32_0 : i32, i32
  }
  func.func @transform_6(%arg0: i32) -> (i32, i32) {
    %c0_i32 = arith.constant 0 : i32
    %c0_i32_0 = arith.constant 0 : i32
    return %arg0, %c0_i32 : i32, i32
  }
  func.func @transform_7(%arg0: i32) -> (i32, i32) {
    %c0_i32 = arith.constant 0 : i32
    %c0_i32_0 = arith.constant 0 : i32
    return %arg0, %c0_i32 : i32, i32
  }
}

</mosaic_0001>

<llo_original>
// kernel: tpu_custom_call.1
$region0: #{tpu_custom_call.1}
  #allocation0 [shape = 'u32[]', space=smem, size = 0x4, offset = 0x4, fixed_abs, tag = 'smem constant byte address 0x4 - core index']
  #allocation1 [shape = 'u32[144,128]{1,0:T(1,128)}', space=vmem, size = 0x12000, scoped, tag = 'internal scratch']
  %s0 = inlined_call_operand.hbm [shape: f32[2,16,32], index: 0, kind: input, shape index: {}]
  %s1 = inlined_call_operand.vmem [shape: f32[2,48], index: 1, kind: input, shape index: {}]
  %s2 = inlined_call_operand.hbm [shape: f32[32,64], index: 2, kind: input, shape index: {}]
  %s3 = inlined_call_operand.hbm [shape: f32[48,64], index: 3, kind: input, shape index: {}]
  %s4 = inlined_call_operand.vmem [shape: f32[1,64], index: 4, kind: input, shape index: {}]
  %s5 = inlined_call_operand.vmem [shape: f32[1,64], index: 5, kind: input, shape index: {}]
  %s6 = inlined_call_operand.hbm [shape: f32[2,32], index: 6, kind: output, shape index: {0}]
  %s7 = inlined_call_operand.hbm [shape: f32[2,16], index: 7, kind: output, shape index: {1}]
  %8 = xla_tuple %s6, %s7
  %s9 = sld [smem:[#allocation0]]
  $region54: #{tpu_custom_call.1} parent=0
    _
  %s11 = ssub.s32 1, %s9
  %s12 = scalar_select 0, %s11, %s9
  $region1: #{tpu_custom_call.1} parent=0
    #allocation2 [shape = 'u8[16384]{0}', space=vmem, size = 0x4000, scoped, tag = 'input window, operand 0, single buffered']
    #allocation3 [shape = 's32[1]{0}', space=sflag, size = 0x4, scoped, tag = 'scoped memory for tpu_custom_call.1']
    #allocation4 [shape = 's32[1]{0}', space=sflag, size = 0x4, scoped, tag = 'scoped memory for tpu_custom_call.1']
    #allocation5 [shape = 'u8[16384]{0}', space=vmem, size = 0x4000, scoped, tag = 'input window, operand 2, single buffered']
    #allocation6 [shape = 's32[1]{0}', space=sflag, size = 0x4, scoped, tag = 'scoped memory for tpu_custom_call.1']
    #allocation7 [shape = 'u8[24576]{0}', space=vmem, size = 0x6000, scoped, tag = 'input window, operand 3, single buffered']
    #allocation8 [shape = 'u8[1024]{0}', space=vmem, size = 0x400, scoped, tag = 'output window, operand 0, single buffered']
    #allocation9 [shape = 'u8[1024]{0}', space=vmem, size = 0x400, scoped, tag = 'output window, operand 1, single buffered']
    #allocation10 [shape = 's32[1]{0}', space=sflag, size = 0x4, scoped, tag = 'scoped memory for tpu_custom_call.1']
    %13 = vsyncpa [#allocation3], 0
    %14 = vsyncpa [#allocation6], 0
    %15 = vsyncpa [#allocation4], 0
    %16 = vsyncpa [#allocation10], 0
    // Predicated region
    $region2: #{tpu_custom_call.1} parent=1 // pred_check
      _
    $region3: #{tpu_custom_call.1} parent=1 // pred_check_branch
      %18 = sbr.rel (0) target = $region5
    $region4: #{tpu_custom_call.1} parent=1 // pred_region
      %s20 = ssub.s32 512, 512
      %21 = vsyncadd [#allocation3], %s20
      %s22 = sshll.u32 [#allocation2], 4
      %s23 = int_to_ptr.vmem [resolvable:$true] %s22
      %28 = dma.hbm_to_vmem [thread:$0]  %s0, 512, %s23, [#allocation3], 128, 128, 8
    $region5: #{tpu_custom_call.1} parent=1 // pred_fallthru
      _
    // Predicated region
    $region6: #{tpu_custom_call.1} parent=1 // pred_check
      _
    $region7: #{tpu_custom_call.1} parent=1 // pred_check_branch
      %30 = sbr.rel (0) target = $region9
    $region8: #{tpu_custom_call.1} parent=1 // pred_region
      _
    $region9: #{tpu_custom_call.1} parent=1 // pred_fallthru
      _
    // Predicated region
    $region10: #{tpu_custom_call.1} parent=1 // pred_check
      _
    $region11: #{tpu_custom_call.1} parent=1 // pred_check_branch
      %32 = sbr.rel (0) target = $region13
    $region12: #{tpu_custom_call.1} parent=1 // pred_region
      %s34 = ssub.s32 512, 512
      %35 = vsyncadd [#allocation6], %s34
      %s36 = sshll.u32 [#allocation5], 4
      %s37 = int_to_ptr.vmem [resolvable:$true] %s36
      %42 = dma.hbm_to_vmem [thread:$0]  %s2, 512, %s37, [#allocation6], 128, 128, 8
    $region13: #{tpu_custom_call.1} parent=1 // pred_fallthru
      _
    // Predicated region
    $region14: #{tpu_custom_call.1} parent=1 // pred_check
      _
    $region15: #{tpu_custom_call.1} parent=1 // pred_check_branch
      %44 = sbr.rel (0) target = $region17
    $region16: #{tpu_custom_call.1} parent=1 // pred_region
      %s46 = ssub.s32 768, 768
      %47 = vsyncadd [#allocation6], %s46
      %s48 = sshll.u32 [#allocation7], 4
      %s49 = int_to_ptr.vmem [resolvable:$true] %s48
      %54 = dma.hbm_to_vmem [thread:$0]  %s3, 768, %s49, [#allocation6], 128, 128, 8
    $region17: #{tpu_custom_call.1} parent=1 // pred_fallthru
      _
    // Predicated region
    $region18: #{tpu_custom_call.1} parent=1 // pred_check
      _
    $region19: #{tpu_custom_call.1} parent=1 // pred_check_branch
      %56 = sbr.rel (0) target = $region21
    $region20: #{tpu_custom_call.1} parent=1 // pred_region
      _
    $region21: #{tpu_custom_call.1} parent=1 // pred_fallthru
      _
    // Predicated region
    $region22: #{tpu_custom_call.1} parent=1 // pred_check
      _
    $region23: #{tpu_custom_call.1} parent=1 // pred_check_branch
      %58 = sbr.rel (0) target = $region25
    $region24: #{tpu_custom_call.1} parent=1 // pred_region
      _
    $region25: #{tpu_custom_call.1} parent=1 // pred_fallthru
      _
    // Predicated region
    $region26: #{tpu_custom_call.1} parent=1 // pred_check
      _
    $region27: #{tpu_custom_call.1} parent=1 // pred_check_branch
      %60 = sbr.rel (0) target = $region29
    $region28: #{tpu_custom_call.1} parent=1 // pred_region
      %61 = dma.done [#allocation3], 512
    $region29: #{tpu_custom_call.1} parent=1 // pred_fallthru
      _
    // Predicated region
    $region30: #{tpu_custom_call.1} parent=1 // pred_check
      _
    $region31: #{tpu_custom_call.1} parent=1 // pred_check_branch
      %63 = sbr.rel (0) target = $region33
    $region32: #{tpu_custom_call.1} parent=1 // pred_region
      %64 = dma.done [#allocation6], 512
    $region33: #{tpu_custom_call.1} parent=1 // pred_fallthru
      _
    // Predicated region
    $region34: #{tpu_custom_call.1} parent=1 // pred_check
      _
    $region35: #{tpu_custom_call.1} parent=1 // pred_check_branch
      %66 = sbr.rel (0) target = $region37
    $region36: #{tpu_custom_call.1} parent=1 // pred_region
      %67 = dma.done [#allocation6], 768
    $region37: #{tpu_custom_call.1} parent=1 // pred_fallthru
      _
    %v68 = vld [vmem:[#allocation2] sm:$0xff]
    %v69 = vld [vmem:[#allocation2 + $0x8] sm:$0xff]
    %v70 = vld [vmem:[#allocation2 + $0x10] sm:$0xff]
    %v71 = vld [vmem:[#allocation2 + $0x18] sm:$0xff]
    %v72 = vld [vmem:[%s1] sm:$0x3]
    %v73 = vld [vmem:[#allocation5] sm:$0xff]
    %v74 = vld [vmem:[#allocation5 + $0x8] sm:$0xff]
    %v75 = vld [vmem:[#allocation5 + $0x10] sm:$0xff]
    %v76 = vld [vmem:[#allocation5 + $0x18] sm:$0xff]
    %vm77 = vcmask 261120
    %v79 = vsel %vm77, %v68, 0
    %v82 = vsel %vm77, %v69, 0
    %v85 = vsel %vm77, %v70, 0
    %v88 = vsel %vm77, %v71, 0
    %90 = vmatprep.subr.mxu0 0.0
    %91 = vmatpush1.msra.mxu0 %v73
    %92 = vmatprep.subr.mxu0 0.0
    %93 = vmatpush1.msra.mxu0 %v74
    %94 = vmatprep.subr.mxu0 0.0
    %95 = vmatpush1.msra.mxu0 %v75
    %96 = vmatprep.subr.mxu0 0.0
    %97 = vmatpush1.msra.mxu0 %v76
    %98 = vmatprep.subr.mxu0 0.0
    %99 = vmatpush1.msra.mxu0 0.0
    %100 = vmatprep.subr.mxu0 0.0
    %101 = vmatpush1.msra.mxu0 0.0
    %102 = vmatprep.subr.mxu0 0.0
    %103 = vmatpush1.msra.mxu0 0.0
    %104 = vmatprep.subr.mxu0 0.0
    %105 = vmatpush1.msra.mxu0 0.0
    %106 = vmatprep.subr.mxu0 0.0
    %107 = vmatpush1.msra.mxu0 0.0
    %108 = vmatprep.subr.mxu0 0.0
    %109 = vmatpush1.msra.mxu0 0.0
    %110 = vmatprep.subr.mxu0 0.0
    %111 = vmatpush1.msra.mxu0 0.0
    %112 = vmatprep.subr.mxu0 0.0
    %113 = vmatpush1.msra.mxu0 0.0
    %114 = vmatprep.subr.mxu0 0.0
    %115 = vmatpush1.msra.mxu0 0.0
    %116 = vmatprep.subr.mxu0 0.0
    %117 = vmatpush1.msra.mxu0 0.0
    %118 = vmatprep.subr.mxu0 0.0
    %119 = vmatpush1.msra.mxu0 0.0
    %120 = vmatprep.subr.mxu0 0.0
    %121 = vmatpush1.msra.mxu0 0.0
    %122 = vmatprep.subr.mxu0 0.0
    %123 = vmatpush1.msra.mxu0 0.0
    %124 = vmatprep.subr.mxu0 0.0
    %125 = vmatpush1.msra.mxu0 0.0
    %126 = vmatprep.subr.mxu0 0.0
    %127 = vmatpush1.msra.mxu0 0.0
    %128 = vmatprep.subr.mxu0 0.0
    %129 = vmatpush1.msra.mxu0 0.0
    %130 = vmatprep.subr.mxu0 0.0
    %131 = vmatpush1.msra.mxu0 0.0
    %132 = vmatprep.subr.mxu0 0.0
    %133 = vmatpush1.msra.mxu0 0.0
    %134 = vmatprep.subr.mxu0 0.0
    %135 = vmatpush1.msra.mxu0 0.0
    %136 = vmatprep.subr.mxu0 0.0
    %137 = vmatpush1.msra.mxu0 0.0
    %138 = vmatprep.subr.mxu0 0.0
    %139 = vmatpush1.msra.mxu0 0.0
    %140 = vmatprep.subr.mxu0 0.0
    %141 = vmatpush1.msra.mxu0 0.0
    %142 = vmatprep.subr.mxu0 0.0
    %143 = vmatpush1.msra.mxu0 0.0
    %144 = vmatprep.subr.mxu0 0.0
    %145 = vmatpush1.msra.mxu0 0.0
    %146 = vmatprep.subr.mxu0 0.0
    %147 = vmatpush1.msra.mxu0 0.0
    %148 = vmatprep.subr.mxu0 0.0
    %149 = vmatpush1.msra.mxu0 0.0
    %150 = vmatprep.subr.mxu0 0.0
    %151 = vmatpush1.msra.mxu0 0.0
    %152 = vmatprep.subr.mxu0 0.0
    %153 = vmatpush1.msra.mxu0 0.0
    %154 = vmatprep.mubr.f32.mxu0 0.0
    %155 = vmatmul.mubr.f32.gmra.mrb[0].mxu0 %v79
    %v156 = vpop.f32.mrb[0].mxu0
    %v157 = vadd.f32 0.0, %v156
    %v158 = vpop.f32.mrb[0].mxu0
    %159 = vmatprep.mubr.f32.mxu0 0.0
    %160 = vmatmul.mubr.f32.gmra.mrb[0].mxu0 %v82
    %v161 = vpop.f32.mrb[0].mxu0
    %v162 = vadd.f32 0.0, %v161
    %v163 = vpop.f32.mrb[0].mxu0
    %164 = vmatprep.mubr.f32.mxu0 0.0
    %165 = vmatmul.mubr.f32.gmra.mrb[0].mxu0 %v85
    %v166 = vpop.f32.mrb[0].mxu0
    %v167 = vadd.f32 0.0, %v166
    %v168 = vpop.f32.mrb[0].mxu0
    %169 = vmatprep.mubr.f32.mxu0 0.0
    %170 = vmatmul.mubr.f32.gmra.mrb[0].mxu0 %v88
    %v171 = vpop.f32.mrb[0].mxu0
    %v172 = vadd.f32 0.0, %v171
    %v173 = vpop.f32.mrb[0].mxu0
    %174 = vdwg.mxu0
    %v175 = vld [vmem:[#allocation7] sm:$0xff]
    %v176 = vld [vmem:[#allocation7 + $0x8] sm:$0xff]
    %v177 = vld [vmem:[#allocation7 + $0x10] sm:$0xff]
    %v178 = vld [vmem:[#allocation7 + $0x18] sm:$0xff]
    %v179 = vld [vmem:[#allocation7 + $0x20] sm:$0xff]
    %v180 = vld [vmem:[#allocation7 + $0x28] sm:$0xff]
    %v181 = vld [vmem:[%s4] sm:$0x1]
    %v183 = vlaneseq
    %v184 = vshrl.u32 %v183, 7
    %v185 = vsub.s32 0, %v184
    %v186 = vrot.slane %v181, %v185
    %vm188 = vcmask 392192
    %v190 = vsel %vm188, %v72, 0
    %192 = vmatprep.subr.mxu0 0.0
    %193 = vmatpush1.msra.mxu0 %v175
    %194 = vmatprep.subr.mxu0 0.0
    %195 = vmatpush1.msra.mxu0 %v176
    %196 = vmatprep.subr.mxu0 0.0
    %197 = vmatpush1.msra.mxu0 %v177
    %198 = vmatprep.subr.mxu0 0.0
    %199 = vmatpush1.msra.mxu0 %v178
    %200 = vmatprep.subr.mxu0 0.0
    %201 = vmatpush1.msra.mxu0 %v179
    %202 = vmatprep.subr.mxu0 0.0
    %203 = vmatpush1.msra.mxu0 %v180
    %204 = vmatprep.subr.mxu0 0.0
    %205 = vmatpush1.msra.mxu0 0.0
    %206 = vmatprep.subr.mxu0 0.0
    %207 = vmatpush1.msra.mxu0 0.0
    %208 = vmatprep.subr.mxu0 0.0
    %209 = vmatpush1.msra.mxu0 0.0
    %210 = vmatprep.subr.mxu0 0.0
    %211 = vmatpush1.msra.mxu0 0.0
    %212 = vmatprep.subr.mxu0 0.0
    %213 = vmatpush1.msra.mxu0 0.0
    %214 = vmatprep.subr.mxu0 0.0
    %215 = vmatpush1.msra.mxu0 0.0
    %216 = vmatprep.subr.mxu0 0.0
    %217 = vmatpush1.msra.mxu0 0.0
    %218 = vmatprep.subr.mxu0 0.0
    %219 = vmatpush1.msra.mxu0 0.0
    %220 = vmatprep.subr.mxu0 0.0
    %221 = vmatpush1.msra.mxu0 0.0
    %222 = vmatprep.subr.mxu0 0.0
    %223 = vmatpush1.msra.mxu0 0.0
    %224 = vmatprep.subr.mxu0 0.0
    %225 = vmatpush1.msra.mxu0 0.0
    %226 = vmatprep.subr.mxu0 0.0
    %227 = vmatpush1.msra.mxu0 0.0
    %228 = vmatprep.subr.mxu0 0.0
    %229 = vmatpush1.msra.mxu0 0.0
    %230 = vmatprep.subr.mxu0 0.0
    %231 = vmatpush1.msra.mxu0 0.0
    %232 = vmatprep.subr.mxu0 0.0
    %233 = vmatpush1.msra.mxu0 0.0
    %234 = vmatprep.subr.mxu0 0.0
    %235 = vmatpush1.msra.mxu0 0.0
    %236 = vmatprep.subr.mxu0 0.0
    %237 = vmatpush1.msra.mxu0 0.0
    %238 = vmatprep.subr.mxu0 0.0
    %239 = vmatpush1.msra.mxu0 0.0
    %240 = vmatprep.subr.mxu0 0.0
    %241 = vmatpush1.msra.mxu0 0.0
    %242 = vmatprep.subr.mxu0 0.0
    %243 = vmatpush1.msra.mxu0 0.0
    %244 = vmatprep.subr.mxu0 0.0
    %245 = vmatpush1.msra.mxu0 0.0
    %246 = vmatprep.subr.mxu0 0.0
    %247 = vmatpush1.msra.mxu0 0.0
    %248 = vmatprep.subr.mxu0 0.0
    %249 = vmatpush1.msra.mxu0 0.0
    %250 = vmatprep.subr.mxu0 0.0
    %251 = vmatpush1.msra.mxu0 0.0
    %252 = vmatprep.subr.mxu0 0.0
    %253 = vmatpush1.msra.mxu0 0.0
    %254 = vmatprep.subr.mxu0 0.0
    %255 = vmatpush1.msra.mxu0 0.0
    %256 = vmatprep.mubr.f32.mxu0 0.0
    %257 = vmatmul.mubr.f32.gmra.mrb[0].mxu0 %v190
    %v258 = vpop.f32.mrb[0].mxu0
    %v259 = vadd.f32 %v186, %v258
    %v260 = vpop.f32.mrb[0].mxu0
    %261 = vdwg.mxu0
    %v264 = vunpack.c.l.s4 1966171168
    %v265 = vunpack.c.0.s8 %v264
    %v266 = vlaneseq
    %v267 = vshrl.u32 %v266, 7
    %v268 = vsub.s32 %v265, %v267
    %v269 = vrot.slane %v259, %v268
    %v270 = vcombine.high %v269, %v269
    %v272 = vunpack.c.l.s4 1966171168
    %v273 = vunpack.c.0.s8 %v272
    %v274 = vlaneseq
    %v275 = vshrl.u32 %v274, 7
    %v276 = vsub.s32 %v273, %v275
    %v277 = vrot.slane %v269, %v276
    %v279 = vunpack.c.l.s4 1966171168
    %v280 = vunpack.c.0.s8 %v279
    %v281 = vlaneseq
    %v282 = vshrl.u32 %v281, 7
    %v283 = vsub.s32 %v280, %v282
    %v284 = vrot.slane %v270, %v283
    %v285 = vlaneseq
    %v286 = vshrl.u32 %v285, 7
    %v287 = vsub.s32 0, %v286
    %v288 = vrot.slane %v277, %v287
    %v289 = vlaneseq
    %v290 = vshrl.u32 %v289, 7
    %v291 = vsub.s32 0, %v290
    %v292 = vrot.slane %v284, %v291
    %v295 = vadd.f32 %v157, %v288
    %v296 = vadd.f32 %v162, %v288
    %v297 = vadd.f32 %v167, %v292
    %v298 = vadd.f32 %v172, %v292
    %v299 = vmax.f32 %v295, 0.0
    %v300 = vmax.f32 %v296, 0.0
    %v301 = vmax.f32 %v297, 0.0
    %v302 = vmax.f32 %v298, 0.0
    %v303 = vld [vmem:[%s5] sm:$0x1]
    %v305 = vlaneseq
    %v306 = vshrl.u32 %v305, 7
    %v307 = vsub.s32 0, %v306
    %v308 = vrot.slane %v303, %v307
    %v310 = vmul.f32 %v299, %v308
    %v311 = vmul.f32 %v300, %v308
    %v312 = vmul.f32 %v301, %v308
    %v313 = vmul.f32 %v302, %v308
    %vm314 = vcmask 523264
    %v315 = vsel %vm314, %v310, 0.0
    %316 = vadd.xlane.f32.xlu0 %v315
    %v317 = vpop.xlane.xlu0 %316
    %v318 = vsel %vm314, %v311, 0.0
    %319 = vadd.xlane.f32.xlu0 %v318
    %v320 = vpop.xlane.xlu0 %319
    %v321 = vsel %vm314, %v312, 0.0
    %322 = vadd.xlane.f32.xlu0 %v321
    %v323 = vpop.xlane.xlu0 %322
    %v324 = vsel %vm314, %v313, 0.0
    %325 = vadd.xlane.f32.xlu0 %v324
    %v326 = vpop.xlane.xlu0 %325
    %v327 = vmax.f32 %v317, %v320
    %v328 = vrot.slane %v327, 4
    %v329 = vmax.f32 %v327, %v328
    %v330 = vrot.slane %v329, 2
    %v331 = vmax.f32 %v329, %v330
    %v332 = vrot.slane %v331, 1
    %v333 = vmax.f32 %v331, %v332
    %v334 = vmax.f32 %v323, %v326
    %v335 = vrot.slane %v334, 4
    %v336 = vmax.f32 %v334, %v335
    %v337 = vrot.slane %v336, 2
    %v338 = vmax.f32 %v336, %v337
    %v339 = vrot.slane %v338, 1
    %v340 = vmax.f32 %v338, %v339
    %v341 = vsub.f32 %v317, %v333
    %v342 = vsub.f32 %v320, %v333
    %v343 = vsub.f32 %v323, %v340
    %v344 = vsub.f32 %v326, %v340
    %v345 = vmul.f32 %v341, 1.442695
    %v346 = vpow.pop %v345
    %v347 = vmul.f32 %v342, 1.442695
    %v348 = vpow.pop %v347
    %v349 = vmul.f32 %v343, 1.442695
    %v350 = vpow.pop %v349
    %v351 = vmul.f32 %v344, 1.442695
    %v352 = vpow.pop %v351
    %v353 = vadd.f32 %v346, %v348
    %v354 = vrot.slane %v353, 4
    %v355 = vadd.f32 %v353, %v354
    %v356 = vrot.slane %v355, 2
    %v357 = vadd.f32 %v355, %v356
    %v358 = vrot.slane %v357, 1
    %v359 = vadd.f32 %v357, %v358
    %v360 = vadd.f32 %v350, %v352
    %v361 = vrot.slane %v360, 4
    %v362 = vadd.f32 %v360, %v361
    %v363 = vrot.slane %v362, 2
    %v364 = vadd.f32 %v362, %v363
    %v365 = vrot.slane %v364, 1
    %v366 = vadd.f32 %v364, %v365
    %v367 = vrcp.pop %v359
    %v368 = vrcp.pop %v366
    %v369 = vmul.f32 %v346, %v367
    %v370 = vmul.f32 %v348, %v367
    %v371 = vmul.f32 %v350, %v368
    %v372 = vmul.f32 %v352, %v368
    %v373 = vmul.f32 %v68, %v369
    %v374 = vmul.f32 %v69, %v370
    %v375 = vmul.f32 %v70, %v371
    %v376 = vmul.f32 %v71, %v372
    %v377 = vsel %vm77, %v373, 0.0
    %v378 = vsel %vm77, %v374, 0.0
    %v379 = vadd.f32 %v377, %v378
    %v380 = vrot.slane %v379, 4
    %v381 = vadd.f32 %v379, %v380
    %v382 = vrot.slane %v381, 2
    %v383 = vadd.f32 %v381, %v382
    %v384 = vrot.slane %v383, 1
    %v385 = vadd.f32 %v383, %v384
    %v386 = vsel %vm77, %v375, 0.0
    %v387 = vsel %vm77, %v376, 0.0
    %v388 = vadd.f32 %v386, %v387
    %v389 = vrot.slane %v388, 4
    %v390 = vadd.f32 %v388, %v389
    %v391 = vrot.slane %v390, 2
    %v392 = vadd.f32 %v390, %v391
    %v393 = vrot.slane %v392, 1
    %v394 = vadd.f32 %v392, %v393
    %vm397 = vcmask 1041409
    %v398 = vsel %vm397, %v394, %v385
    %vm400 = vcmask 254976
    %401 = vst.msk [vmem:[#allocation8] sm:$0x3] %vm400, %v398
    %v406 = vlaneseq
    %v407 = vand.u32 %v406, 127
    %v408 = vlaneseq
    %v409 = vshrl.u32 %v408, 7
    %v410 = vsub.s32 %v407, %v409
    %v411 = vrot.slane %v369, %v410
    %v412 = vadd.s32 %v407, 4294967288
    %v413 = vlaneseq
    %v414 = vshrl.u32 %v413, 7
    %v415 = vsub.s32 %v412, %v414
    %v416 = vrot.slane %v370, %v415
    %vm417 = vcmask 130112
    %v418 = vsel %vm417, %v416, %v411
    %v419 = vlaneseq
    %v420 = vshrl.u32 %v419, 7
    %v421 = vsub.s32 %v407, %v420
    %v422 = vrot.slane %v371, %v421
    %v423 = vlaneseq
    %v424 = vshrl.u32 %v423, 7
    %v425 = vsub.s32 %v412, %v424
    %v426 = vrot.slane %v372, %v425
    %v427 = vsel %vm417, %v426, %v422
    %v428 = vsel %vm397, %v427, %v418
    %vm430 = vcmask 123904
    %431 = vst.msk [vmem:[#allocation9] sm:$0x3] %vm430, %v428
    // Predicated region
    $region38: #{tpu_custom_call.1} parent=1 // pred_check
      _
    $region39: #{tpu_custom_call.1} parent=1 // pred_check_branch
      %433 = sbr.rel (0) target = $region41
    $region40: #{tpu_custom_call.1} parent=1 // pred_region
      %s435 = ssub.s32 32, 32
      %436 = vsyncadd [#allocation4], %s435
      %s438 = sshll.u32 [#allocation8], 4
      %s439 = int_to_ptr.vmem [resolvable:$true] %s438
      %441 = dma.vmem_to_hbm [thread:$0]  %s439, 32, %s6, [#allocation4]
    $region41: #{tpu_custom_call.1} parent=1 // pred_fallthru
      _
    // Predicated region
    $region42: #{tpu_custom_call.1} parent=1 // pred_check
      _
    $region43: #{tpu_custom_call.1} parent=1 // pred_check_branch
      %443 = sbr.rel (0) target = $region45
    $region44: #{tpu_custom_call.1} parent=1 // pred_region
      %s445 = ssub.s32 32, 32
      %446 = vsyncadd [#allocation10], %s445
      %s448 = sshll.u32 [#allocation9], 4
      %s449 = int_to_ptr.vmem [resolvable:$true] %s448
      %451 = dma.vmem_to_hbm [thread:$0]  %s449, 32, %s7, [#allocation10]
    $region45: #{tpu_custom_call.1} parent=1 // pred_fallthru
      _
    // Predicated region
    $region46: #{tpu_custom_call.1} parent=1 // pred_check
      _
    $region47: #{tpu_custom_call.1} parent=1 // pred_check_branch
      %453 = sbr.rel (0) target = $region49
    $region48: #{tpu_custom_call.1} parent=1 // pred_region
      %454 = dma.done [#allocation4], 32
    $region49: #{tpu_custom_call.1} parent=1 // pred_fallthru
      _
    // Predicated region
    $region50: #{tpu_custom_call.1} parent=1 // pred_check
      _
    $region51: #{tpu_custom_call.1} parent=1 // pred_check_branch
      %456 = sbr.rel (0) target = $region53
    $region52: #{tpu_custom_call.1} parent=1 // pred_region
      %457 = dma.done [#allocation10], 32
    $region53: #{tpu_custom_call.1} parent=1 // pred_fallthru
      _
    %458 = vsyncpa [#allocation3], 1
    %459 = vsyncpa [#allocation6], 1
    %460 = vsyncpa [#allocation4], 1
    %461 = vsyncpa [#allocation10], 1

</llo_original>
